<compile_context>
chip_gen: v7x
topology: tpu7x:2x2x1
jax: 0.10.0
libtpu: 0.0.40
codegen_flags: <defaults>
</compile_context>

<pallas_src>
import functools

import jax
import jax.numpy as jnp
from jax.experimental import pallas as pl
from jax.experimental.pallas import tpu as pltpu

_LANES = 128


def _round_up(x, m):
    return ((x + m - 1) // m) * m


def _smooth_l1_partial_sum_kernel(*refs, use_weight, beta):
    """Accumulate per-block smooth-L1 partial sums into a (1, 1) f32 output."""
    if use_weight:
        o_ref, t_ref, w_ref, out_ref = refs
    else:
        o_ref, t_ref, out_ref = refs

    @pl.when(pl.program_id(0) == 0)
    def _():
        out_ref[...] = jnp.zeros_like(out_ref)

    o = o_ref[...].astype(jnp.float32)
    t = t_ref[...].astype(jnp.float32)
    diff = o - t
    if use_weight:
        # smooth_l1(w*o, w*t) only depends on w*(o - t): one multiply, not two.
        diff = diff * w_ref[...].astype(jnp.float32)

    abs_d = jnp.abs(diff)
    # F.smooth_l1_loss elementwise: 0.5*x^2/beta if |x| < beta else |x| - 0.5*beta
    # (beta is a compile-time constant; the division is folded.)
    elem = jnp.where(abs_d < beta, (0.5 / beta) * diff * diff, abs_d - 0.5 * beta)
    out_ref[...] += jnp.sum(elem)


def _flatten_lane_dense(x, padded_elems):
    """Flatten to 1-D, zero-pad, and view as a lane-dense (rows, 128) slab."""
    flat = x.reshape(-1)
    pad = padded_elems - flat.shape[0]
    if pad:
        flat = jnp.pad(flat, (0, pad))  # zeros contribute 0 to the loss sum
    return flat.reshape(padded_elems // _LANES, _LANES)


def smooth_l1_loss(output, target, target_weight=None, *,
                   use_target_weight=False, loss_weight=1.0, beta=1.0,
                   max_block_rows=512):
    """JAX/Pallas equivalent of mmpose SmoothL1Loss.forward."""
    assert beta > 0.0, "beta must be > 0 (PyTorch special-cases beta == 0)"
    assert max_block_rows % 8 == 0
    N, K, C = output.shape
    n_elems = N * K * C

    # Lane-dense tiling: rows of 128 lanes, block_rows rows per grid step.
    m = (n_elems + _LANES - 1) // _LANES
    if m <= max_block_rows:
        block_rows = _round_up(m, 8)      # single block, sublane-aligned
        m_pad = block_rows
    else:
        block_rows = max_block_rows       # 512 rows * 128 lanes * 4 B = 256 KiB
        m_pad = _round_up(m, block_rows)
    padded_elems = m_pad * _LANES
    num_blocks = m_pad // block_rows

    args = [_flatten_lane_dense(output, padded_elems),
            _flatten_lane_dense(target, padded_elems)]
    if use_target_weight:
        # Only DMA the weight when it is actually used.
        w = jnp.broadcast_to(target_weight, output.shape).astype(output.dtype)
        args.append(_flatten_lane_dense(w, padded_elems))

    block_spec = pl.BlockSpec((block_rows, _LANES), lambda i: (i, 0))
    in_specs = [block_spec] * len(args)

    kernel = functools.partial(_smooth_l1_partial_sum_kernel,
                               use_weight=use_target_weight, beta=float(beta))

    total = pl.pallas_call(
        kernel,
        grid=(num_blocks,),
        in_specs=in_specs,
        # (1, 1) accumulator: same output block every grid step -> reduction axis.
        out_specs=pl.BlockSpec((1, 1), lambda i: (0, 0)),
        out_shape=jax.ShapeDtypeStruct((1, 1), jnp.float32),
        compiler_params=pltpu.CompilerParams(dimension_semantics=("arbitrary",)),
    )(*args)[0, 0]

    mean_loss = total / jnp.float32(n_elems)      # 'mean' over real elements only
    return mean_loss / jnp.float32(K) * jnp.float32(loss_weight)


def _reference(output, target, target_weight, use_target_weight, loss_weight,
               beta=1.0):
    o = output.astype(jnp.float32)
    t = target.astype(jnp.float32)
    if use_target_weight:
        o = o * target_weight
        t = t * target_weight
    d = o - t
    a = jnp.abs(d)
    elem = jnp.where(a < beta, 0.5 * d * d / beta, a - 0.5 * beta)
    return elem.mean() / output.shape[1] * loss_weight


if __name__ == "__main__":
    key = jax.random.PRNGKey(0)
    k1, k2, k3 = jax.random.split(key, 3)

    ok = True

    # Case 1: tiny mmpose-like shape (batch=2, keypoints=8, coords=2).
    N, K, C = 2, 8, 2
    output = jax.random.normal(k1, (N, K, C), dtype=jnp.float32)
    target = jax.random.normal(k2, (N, K, C), dtype=jnp.float32)
    target_weight = jnp.broadcast_to(
        jax.random.uniform(k3, (N, K, 1), dtype=jnp.float32), (N, K, C))

    for use_tw in (False, True):
        loss = jax.block_until_ready(
            smooth_l1_loss(output, target, target_weight,
                           use_target_weight=use_tw, loss_weight=1.0))
        ref = _reference(output, target, target_weight, use_tw, 1.0)
        if not jnp.allclose(loss, ref, rtol=1e-5, atol=1e-6):
            ok = False
            print("MISMATCH case1", use_tw, float(loss), float(ref))

    # Case 2: small block-row cap to exercise the multi-block pipelined
    # reduction path (grid of 2 blocks) at a still-small shape.
    N2, K2, C2 = 16, 64, 2
    o2 = jax.random.normal(k1, (N2, K2, C2), dtype=jnp.float32)
    t2 = jax.random.normal(k2, (N2, K2, C2), dtype=jnp.float32)
    w2 = jnp.broadcast_to(
        jax.random.uniform(k3, (N2, K2, 1), dtype=jnp.float32), (N2, K2, C2))

    for use_tw in (False, True):
        loss = jax.block_until_ready(
            smooth_l1_loss(o2, t2, w2, use_target_weight=use_tw,
                           loss_weight=2.0, max_block_rows=8))
        ref = _reference(o2, t2, w2, use_tw, 2.0)
        if not jnp.allclose(loss, ref, rtol=1e-5, atol=1e-6):
            ok = False
            print("MISMATCH case2", use_tw, float(loss), float(ref))

    if ok:
        print("KERNEL_OK")
</pallas_src>

<mosaic_0001>
module attributes {stable_mosaic.version = 11 : i64} {
  func.func @_smooth_l1_partial_sum_kernel(%arg0: i32, %arg1: memref<8x128xf32, #tpu.memory_space<vmem>>, %arg2: memref<8x128xf32, #tpu.memory_space<vmem>>, %arg3: memref<1x1xf32, #tpu.memory_space<vmem>>) attributes {dimension_semantics = [#tpu.dimension_semantics<arbitrary>], iteration_bounds = array<i64: 1>, scalar_prefetch = 0 : i64, scratch_operands = 0 : i64, tpu.core_type = #tpu.core_type<tc>, window_params = [{transform_indices = @transform_0, window_bounds = array<i64: 8, 128>}, {transform_indices = @transform_1, window_bounds = array<i64: 8, 128>}, {pipeline_mode = #tpu.pipeline_mode<synchronous>, transform_indices = @transform_2, window_bounds = array<i64: 1, 1>}]} {
    %c0_i32 = arith.constant 0 : i32
    %0 = arith.cmpi eq, %arg0, %c0_i32 : i32
    %1 = arith.extui %0 : i1 to i32
    %c0_i32_0 = arith.constant 0 : i32
    %2 = arith.cmpi ne, %1, %c0_i32_0 : i32
    scf.if %2 {
      %cst_11 = arith.constant 0.000000e+00 : f32
      %23 = vector.broadcast %cst_11 : f32 to vector<1x1xf32>
      %c0_12 = arith.constant 0 : index
      %c0_13 = arith.constant 0 : index
      %24 = vector.load %arg3[%c0_12, %c0_13] : memref<1x1xf32, #tpu.memory_space<vmem>>, vector<1x1xf32>
      tpu.vector_store %arg3[%c0_12, %c0_13], %23 {strides = array<i32>} : memref<1x1xf32, #tpu.memory_space<vmem>>, vector<1x1xf32>,
    } else {
    }
    %c0 = arith.constant 0 : index
    %c0_1 = arith.constant 0 : index
    %3 = vector.load %arg1[%c0, %c0_1] : memref<8x128xf32, #tpu.memory_space<vmem>>, vector<8x128xf32>
    %c0_2 = arith.constant 0 : index
    %c0_3 = arith.constant 0 : index
    %4 = vector.load %arg2[%c0_2, %c0_3] : memref<8x128xf32, #tpu.memory_space<vmem>>, vector<8x128xf32>
    %5 = arith.subf %3, %4 : vector<8x128xf32>
    %6 = math.absf %5 : vector<8x128xf32>
    %cst = arith.constant 1.000000e+00 : f32
    %7 = vector.broadcast %cst : f32 to vector<8x128xf32>
    %8 = arith.cmpf olt, %6, %7 : vector<8x128xf32>
    %cst_4 = arith.constant 5.000000e-01 : f32
    %9 = vector.broadcast %cst_4 : f32 to vector<8x128xf32>
    %10 = arith.mulf %9, %5 : vector<8x128xf32>
    %11 = arith.mulf %10, %5 : vector<8x128xf32>
    %cst_5 = arith.constant 5.000000e-01 : f32
    %12 = vector.broadcast %cst_5 : f32 to vector<8x128xf32>
    %13 = arith.subf %6, %12 : vector<8x128xf32>
    %14 = arith.select %8, %11, %13 : vector<8x128xi1>, vector<8x128xf32>
    %c0_6 = arith.constant 0 : index
    %c0_7 = arith.constant 0 : index
    %15 = vector.load %arg3[%c0_6, %c0_7] : memref<1x1xf32, #tpu.memory_space<vmem>>, vector<1x1xf32>
    %16 = vector.shape_cast %14 : vector<8x128xf32> to vector<1x8x128xf32>
    %cst_8 = arith.constant dense<0.000000e+00> : vector<1xf32>
    %17 = vector.multi_reduction <add>, %16, %cst_8 [1, 2] : vector<1x8x128xf32> to vector<1xf32>
    %18 = vector.shape_cast %17 : vector<1xf32> to vector<1x1x1xf32>
    %19 = vector.extract %18[0, 0, 0] : f32 from vector<1x1x1xf32>
    %20 = vector.broadcast %19 : f32 to vector<1x1xf32>
    %21 = arith.addf %15, %20 : vector<1x1xf32>
    %c0_9 = arith.constant 0 : index
    %c0_10 = arith.constant 0 : index
    %22 = vector.load %arg3[%c0_9, %c0_10] : memref<1x1xf32, #tpu.memory_space<vmem>>, vector<1x1xf32>
    tpu.vector_store %arg3[%c0_9, %c0_10], %21 {strides = array<i32>} : memref<1x1xf32, #tpu.memory_space<vmem>>, vector<1x1xf32>,
    return
  }
  func.func @transform_0(%arg0: i32) -> (i32, i32) {
    %c0_i32 = arith.constant 0 : i32
    %c0_i32_0 = arith.constant 0 : i32
    return %arg0, %c0_i32 : i32, i32
  }
  func.func @transform_1(%arg0: i32) -> (i32, i32) {
    %c0_i32 = arith.constant 0 : i32
    %c0_i32_0 = arith.constant 0 : i32
    return %arg0, %c0_i32 : i32, i32
  }
  func.func @transform_2(%arg0: i32) -> (i32, i32) {
    %c0_i32 = arith.constant 0 : i32
    %c0_i32_0 = arith.constant 0 : i32
    %c0_i32_1 = arith.constant 0 : i32
    return %c0_i32, %c0_i32_0 : i32, i32
  }
}

</mosaic_0001>

<llo_original>
// kernel: tpu_custom_call.1
$region0: #{tpu_custom_call.1}
  #allocation0 [shape = 'u32[]', space=smem, size = 0x4, offset = 0x4, fixed_abs, tag = 'smem constant byte address 0x4 - core index']
  #allocation1 [shape = 'u32[144,128]{1,0:T(1,128)}', space=vmem, size = 0x12000, scoped, tag = 'internal scratch']
  %s0 = inlined_call_operand.hbm [shape: f32[8,128], index: 0, kind: input, shape index: {}]
  %s1 = inlined_call_operand.hbm [shape: f32[8,128], index: 1, kind: input, shape index: {}]
  %s2 = inlined_call_operand.hbm [shape: f32[1,1], index: 2, kind: output, shape index: {}]
  %s3 = sld [smem:[#allocation0]]
  $region30: #{tpu_custom_call.1} parent=0
    _
  %s5 = ssub.s32 1, %s3
  %s6 = scalar_select 0, %s5, %s3
  $region1: #{tpu_custom_call.1} parent=0
    #allocation2 [shape = 'u8[4096]{0}', space=vmem, size = 0x1000, scoped, tag = 'input window, operand 0, single buffered']
    #allocation3 [shape = 's32[1]{0}', space=sflag, size = 0x4, scoped, tag = 'scoped memory for tpu_custom_call.1']
    #allocation4 [shape = 's32[1]{0}', space=sflag, size = 0x4, scoped, tag = 'scoped memory for tpu_custom_call.1']
    #allocation5 [shape = 'u8[4096]{0}', space=vmem, size = 0x1000, scoped, tag = 'input window, operand 1, single buffered']
    #allocation6 [shape = 's32[1]{0}', space=sflag, size = 0x4, scoped, tag = 'scoped memory for tpu_custom_call.1']
    #allocation7 [shape = 'u8[512]{0}', space=vmem, size = 0x400, scoped, tag = 'output window, operand 0, single buffered']
    %7 = vsyncpa [#allocation3], 0
    %8 = vsyncpa [#allocation6], 0
    %9 = vsyncpa [#allocation4], 0
    // Predicated region
    $region2: #{tpu_custom_call.1} parent=1 // pred_check
      _
    $region3: #{tpu_custom_call.1} parent=1 // pred_check_branch
      %11 = sbr.rel (0) target = $region5
    $region4: #{tpu_custom_call.1} parent=1 // pred_region
      %s13 = ssub.s32 128, 128
      %14 = vsyncadd [#allocation3], %s13
      %s16 = sshll.u32 [#allocation2], 4
      %s17 = int_to_ptr.vmem [resolvable:$true] %s16
      %19 = dma.hbm_to_vmem [thread:$0]  %s0, 128, %s17, [#allocation3]
    $region5: #{tpu_custom_call.1} parent=1 // pred_fallthru
      _
    // Predicated region
    $region6: #{tpu_custom_call.1} parent=1 // pred_check
      _
    $region7: #{tpu_custom_call.1} parent=1 // pred_check_branch
      %21 = sbr.rel (0) target = $region9
    $region8: #{tpu_custom_call.1} parent=1 // pred_region
      %s23 = ssub.s32 128, 128
      %24 = vsyncadd [#allocation6], %s23
      %s26 = sshll.u32 [#allocation5], 4
      %s27 = int_to_ptr.vmem [resolvable:$true] %s26
      %29 = dma.hbm_to_vmem [thread:$0]  %s1, 128, %s27, [#allocation6]
    $region9: #{tpu_custom_call.1} parent=1 // pred_fallthru
      _
    // Predicated region
    $region10: #{tpu_custom_call.1} parent=1 // pred_check
      _
    $region11: #{tpu_custom_call.1} parent=1 // pred_check_branch
      %31 = sbr.rel (0) target = $region13
    $region12: #{tpu_custom_call.1} parent=1 // pred_region
      %32 = dma.done [#allocation3], 128
    $region13: #{tpu_custom_call.1} parent=1 // pred_fallthru
      _
    // Predicated region
    $region14: #{tpu_custom_call.1} parent=1 // pred_check
      _
    $region15: #{tpu_custom_call.1} parent=1 // pred_check_branch
      %34 = sbr.rel (0) target = $region17
    $region16: #{tpu_custom_call.1} parent=1 // pred_region
      %35 = dma.done [#allocation6], 128
    $region17: #{tpu_custom_call.1} parent=1 // pred_fallthru
      _
    %p36 = scmp.eq.s32.totalorder 0, 0
    // Predicated region
    $region18: #{tpu_custom_call.1} parent=1 // pred_check
      %p37 = pneg %p36
    $region19: #{tpu_custom_call.1} parent=1 // pred_check_branch
      %39 = sbr.rel (%p37) target = $region21
    $region20: #{tpu_custom_call.1} parent=1 // pred_region
      %vm40 = vcmask 0
      %41 = vst.msk [vmem:[#allocation7] sm:$0x1] %vm40, 0.0
    $region21: #{tpu_custom_call.1} parent=1 // pred_fallthru
      _
    %v42 = vld [vmem:[#allocation2] sm:$0xff]
    %v43 = vld [vmem:[#allocation5] sm:$0xff]
    %v44 = vsub.f32 %v42, %v43
    %v45 = vand.u32 2147483647, %v44
    %vm46 = vcmp.lt.f32.partialorder %v45, 1.0
    %v47 = vmul.f32 %v44, 0.5
    %v48 = vmul.f32 %v47, %v44
    %v49 = vsub.f32 %v45, 0.5
    %v50 = vsel %vm46, %v48, %v49
    %v51 = vld [vmem:[#allocation7] sm:$0x1]
    %52 = vadd.xlane.f32.xlu0 %v50
    %v53 = vpop.xlane.xlu0 %52
    %v54 = vrot.slane %v53, 4
    %v55 = vadd.f32 %v53, %v54
    %v56 = vrot.slane %v55, 2
    %v57 = vadd.f32 %v55, %v56
    %v58 = vrot.slane %v57, 1
    %v59 = vadd.f32 %v57, %v58
    %s60 = vtos %v59
    %v61 = vstv %s60
    %v62 = vadd.f32 %v51, %v61
    %vm63 = vcmask 0
    %64 = vst.msk [vmem:[#allocation7] sm:$0x1] %vm63, %v62
    // Predicated region
    $region22: #{tpu_custom_call.1} parent=1 // pred_check
      _
    $region23: #{tpu_custom_call.1} parent=1 // pred_check_branch
      %66 = sbr.rel (0) target = $region25
    $region24: #{tpu_custom_call.1} parent=1 // pred_region
      %s68 = ssub.s32 16, 16
      %69 = vsyncadd [#allocation4], %s68
      %s71 = sshll.u32 [#allocation7], 4
      %s72 = int_to_ptr.vmem [resolvable:$true] %s71
      %74 = dma.vmem_to_hbm [thread:$0]  %s72, 16, %s2, [#allocation4]
    $region25: #{tpu_custom_call.1} parent=1 // pred_fallthru
      _
    // Predicated region
    $region26: #{tpu_custom_call.1} parent=1 // pred_check
      _
    $region27: #{tpu_custom_call.1} parent=1 // pred_check_branch
      %76 = sbr.rel (0) target = $region29
    $region28: #{tpu_custom_call.1} parent=1 // pred_region
      %77 = dma.done [#allocation4], 16
    $region29: #{tpu_custom_call.1} parent=1 // pred_fallthru
      _
    %78 = vsyncpa [#allocation3], 1
    %79 = vsyncpa [#allocation6], 1
    %80 = vsyncpa [#allocation4], 1

</llo_original>
